<compile_context>
chip_gen: v7x
topology: tpu7x:2x2x1
jax: 0.10.0
libtpu: 0.0.40
codegen_flags: <defaults>
</compile_context>

<pallas_src>
import functools

import jax
import jax.numpy as jnp
from jax.experimental import pallas as pl
from jax.experimental.pallas import tpu as pltpu


def _lstm_kernel(x_ref, wih_ref, whh_ref, b_ref, wout_ref, bout_ref, y_ref,
                 *, T, Bp, H):
    """Whole LSTM forward + final Linear in one invocation, all operands in VMEM.

    x_ref    : (T*Bp, I)  time-major; rows [t*Bp:(t+1)*Bp] are timestep t
    wih_ref  : (I, 4H)    W_ih^T, PyTorch gate order i|f|g|o
    whh_ref  : (H, 4H)    W_hh^T
    b_ref    : (1, 4H)    b_ih + b_hh
    wout_ref : (H, O)     W_linear^T
    bout_ref : (1, O)     b_linear
    y_ref    : (Bp, O)
    """
    # Phase 1 (no sequential dependency): input projection for all timesteps.
    xp = (jnp.dot(x_ref[...], wih_ref[...], preferred_element_type=jnp.float32)
          + b_ref[...])                                       # (T*Bp, 4H)

    whh = whh_ref[...]                                        # (H, 4H), resident

    # Per-lane affine turning one packed tanh into sigmoid(i,f,o) | tanh(g):
    #   sigmoid(x) = 0.5 * tanh(0.5 * x) + 0.5
    lane = jax.lax.broadcasted_iota(jnp.int32, (1, 4 * H), 1)
    is_g = jnp.logical_and(lane >= 2 * H, lane < 3 * H)
    alpha = jnp.where(is_g, 1.0, 0.5).astype(jnp.float32)     # (1, 4H)
    beta = jnp.where(is_g, 0.0, 0.5).astype(jnp.float32)      # (1, 4H)

    h = jnp.zeros((Bp, H), jnp.float32)
    c = jnp.zeros((Bp, H), jnp.float32)

    # Phase 2 (serial recurrence): T is small & static -> full static unroll.
    # NOTE: switch to lax.fori_loop(unroll=True) if T grows beyond ~32.
    for t in range(T):
        gates = (xp[t * Bp:(t + 1) * Bp, :]                   # (Bp, 4H)
                 + jnp.dot(h, whh, preferred_element_type=jnp.float32))
        # Single EUP pass for all four gates.
        act = jnp.tanh(gates * alpha) * alpha + beta          # [sig(i)|sig(f)|tanh(g)|sig(o)]
        # Half-width roll pairs i-lanes with g-lanes (and f with o); shift of
        # exactly half the lane extent is direction-independent, so i*g lands
        # at lane offset 0, already aligned with c.
        ig = (act * pltpu.roll(act, shift=2 * H, axis=1))[:, 0:H]
        f_g = act[:, H:2 * H]
        o_g = act[:, 3 * H:4 * H]
        c = f_g * c + ig
        h = o_g * jnp.tanh(c)

    # Final Linear on the last hidden state.
    y = (jnp.dot(h, wout_ref[...], preferred_element_type=jnp.float32)
         + bout_ref[...])                                     # (Bp, O)
    y_ref[...] = y.astype(y_ref.dtype)


def prepare_lstm_params(w_ih, w_hh, b_ih, b_hh, w_out, b_out):
    """One-time (per-model) preprocessing of the constant weights.

    PyTorch conventions in: w_ih (4H, I), w_hh (4H, H), b_ih (4H,), b_hh (4H,),
    w_out (O, H), b_out (O,).  Returns kernel-ready operands.
    """
    wih_t = jnp.asarray(w_ih, jnp.float32).T                       # (I, 4H)
    whh_t = jnp.asarray(w_hh, jnp.float32).T                       # (H, 4H)
    b = (jnp.asarray(b_ih, jnp.float32)
         + jnp.asarray(b_hh, jnp.float32)).reshape(1, -1)          # (1, 4H)
    wout_t = jnp.asarray(w_out, jnp.float32).T                     # (H, O)
    bout = jnp.asarray(b_out, jnp.float32).reshape(1, -1)          # (1, O)
    return wih_t, whh_t, b, wout_t, bout


@jax.jit
def lstm_model_forward(x_bti, wih_t, whh_t, b, wout_t, bout):
    """x_bti: (B, T, I) float32; preprocessed params from prepare_lstm_params.
       Returns Y: (B, O)."""
    B, T, I = x_bti.shape
    H = whh_t.shape[0]
    O = wout_t.shape[1]
    Bp = ((B + 7) // 8) * 8                      # pad batch to sublane multiple

    # Per-call activation glue (compiled into this same jit): time-major,
    # batch-pad, lane-friendly 2-D slab.  Padded rows run harmless gate math
    # (rows never mix) and are sliced off at the end.
    x_tbi = jnp.transpose(x_bti.astype(jnp.float32), (1, 0, 2))   # (T, B, I)
    x_tbi = jnp.pad(x_tbi, ((0, 0), (0, Bp - B), (0, 0)))
    x2d = x_tbi.reshape(T * Bp, I)                                # (T*Bp, I)

    vmem = pl.BlockSpec(memory_space=pltpu.MemorySpace.VMEM)      # fully resident
    y_pad = pl.pallas_call(
        functools.partial(_lstm_kernel, T=T, Bp=Bp, H=H),
        out_shape=jax.ShapeDtypeStruct((Bp, O), jnp.float32),
        in_specs=[vmem] * 6,
        out_specs=vmem,
        # Gridless on purpose: footprint ~100 KiB, so no pipelining needed.
        # On v7x, add a "parallel" batch grid axis only once Bp > 8.
    )(x2d, wih_t, whh_t, b, wout_t, bout)
    return y_pad[:B]


def _reference(x, w_ih, w_hh, b_ih, b_hh, w_out, b_out):
    """Pure-JAX reference matching torch.nn.LSTM(batch_first) + Linear."""
    B, T, I = x.shape
    H = w_hh.shape[1]
    h = jnp.zeros((B, H), jnp.float32)
    c = jnp.zeros((B, H), jnp.float32)
    for t in range(T):
        gates = x[:, t, :] @ w_ih.T + b_ih + h @ w_hh.T + b_hh
        i = jax.nn.sigmoid(gates[:, 0 * H:1 * H])
        f = jax.nn.sigmoid(gates[:, 1 * H:2 * H])
        g = jnp.tanh(gates[:, 2 * H:3 * H])
        o = jax.nn.sigmoid(gates[:, 3 * H:4 * H])
        c = f * c + i * g
        h = o * jnp.tanh(c)
    return h @ w_out.T + b_out


if __name__ == "__main__":
    # Small shapes: batch=2, seq=8, num_inputs=4, num_hidden=32, num_outputs=4
    B, T, I, H, O = 2, 8, 4, 32, 4

    key = jax.random.PRNGKey(0)
    ks = jax.random.split(key, 7)
    bound = 1.0 / jnp.sqrt(jnp.float32(H))   # PyTorch default init range
    x = jax.random.normal(ks[0], (B, T, I), jnp.float32)
    w_ih = jax.random.uniform(ks[1], (4 * H, I), jnp.float32, -bound, bound)
    w_hh = jax.random.uniform(ks[2], (4 * H, H), jnp.float32, -bound, bound)
    b_ih = jax.random.uniform(ks[3], (4 * H,), jnp.float32, -bound, bound)
    b_hh = jax.random.uniform(ks[4], (4 * H,), jnp.float32, -bound, bound)
    w_out = jax.random.uniform(ks[5], (O, H), jnp.float32, -bound, bound)
    b_out = jax.random.uniform(ks[6], (O,), jnp.float32, -bound, bound)

    # One-time weight preprocessing (constant for inference).
    params = prepare_lstm_params(w_ih, w_hh, b_ih, b_hh, w_out, b_out)

    y = lstm_model_forward(x, *params)
    y = jax.block_until_ready(y)

    y_ref = _reference(x, w_ih, w_hh, b_ih, b_hh, w_out, b_out)
    assert y.shape == (B, O)
    assert jnp.allclose(y, y_ref, atol=1e-4, rtol=1e-4), (y, y_ref)

    print("KERNEL_OK")
</pallas_src>

<mosaic_0001>
module attributes {stable_mosaic.version = 11 : i64} {
  func.func @_lstm_kernel(%arg0: memref<64x4xf32, #tpu.memory_space<vmem>>, %arg1: memref<4x128xf32, #tpu.memory_space<vmem>>, %arg2: memref<32x128xf32, #tpu.memory_space<vmem>>, %arg3: memref<1x128xf32, #tpu.memory_space<vmem>>, %arg4: memref<32x4xf32, #tpu.memory_space<vmem>>, %arg5: memref<1x4xf32, #tpu.memory_space<vmem>>, %arg6: memref<8x4xf32, #tpu.memory_space<vmem>>) attributes {dimension_semantics = [], scalar_prefetch = 0 : i64, scratch_operands = 0 : i64, tpu.core_type = #tpu.core_type<tc>} {
    %c0 = arith.constant 0 : index
    %c0_0 = arith.constant 0 : index
    %0 = vector.load %arg0[%c0, %c0_0] : memref<64x4xf32, #tpu.memory_space<vmem>>, vector<64x4xf32>
    %c0_1 = arith.constant 0 : index
    %c0_2 = arith.constant 0 : index
    %1 = vector.load %arg1[%c0_1, %c0_2] : memref<4x128xf32, #tpu.memory_space<vmem>>, vector<4x128xf32>
    %cst = arith.constant dense<0.000000e+00> : vector<64x128xf32>
    %2 = tpu.matmul %0, %1, %cst {dimension_numbers = #tpu.dot_dimension_numbers<[1], [0], [0], [1], [0, 0, 1, 1], [], []>} : vector<64x4xf32>, vector<4x128xf32>, vector<64x128xf32> -> vector<64x128xf32>
    %c0_3 = arith.constant 0 : index
    %c0_4 = arith.constant 0 : index
    %3 = vector.load %arg3[%c0_3, %c0_4] : memref<1x128xf32, #tpu.memory_space<vmem>>, vector<1x128xf32>
    %4 = vector.broadcast %3 : vector<1x128xf32> to vector<64x128xf32>
    %5 = arith.addf %2, %4 : vector<64x128xf32>
    %c0_5 = arith.constant 0 : index
    %c0_6 = arith.constant 0 : index
    %6 = vector.load %arg2[%c0_5, %c0_6] : memref<32x128xf32, #tpu.memory_space<vmem>>, vector<32x128xf32>
    %7 = tpu.iota {dimensions = array<i32: 1>} : vector<1x128xi32>
    %c64_i32 = arith.constant 64 : i32
    %8 = vector.broadcast %c64_i32 : i32 to vector<1x128xi32>
    %9 = arith.cmpi sge, %7, %8 : vector<1x128xi32>
    %c96_i32 = arith.constant 96 : i32
    %10 = vector.broadcast %c96_i32 : i32 to vector<1x128xi32>
    %11 = arith.cmpi slt, %7, %10 : vector<1x128xi32>
    %12 = arith.andi %9, %11 : vector<1x128xi1>
    %cst_7 = arith.constant 1.000000e+00 : f32
    %cst_8 = arith.constant 5.000000e-01 : f32
    %13 = vector.broadcast %cst_7 : f32 to vector<1x128xf32>
    %14 = vector.broadcast %cst_8 : f32 to vector<1x128xf32>
    %15 = arith.select %12, %13, %14 : vector<1x128xi1>, vector<1x128xf32>
    %cst_9 = arith.constant 0.000000e+00 : f32
    %cst_10 = arith.constant 5.000000e-01 : f32
    %16 = vector.broadcast %cst_9 : f32 to vector<1x128xf32>
    %17 = vector.broadcast %cst_10 : f32 to vector<1x128xf32>
    %18 = arith.select %12, %16, %17 : vector<1x128xi1>, vector<1x128xf32>
    %cst_11 = arith.constant 0.000000e+00 : f32
    %19 = vector.broadcast %cst_11 : f32 to vector<8x32xf32>
    %cst_12 = arith.constant 0.000000e+00 : f32
    %20 = vector.broadcast %cst_12 : f32 to vector<8x32xf32>
    %21 = vector.extract_strided_slice %5 {offsets = [0, 0], sizes = [8, 128], strides = [1, 1]} : vector<64x128xf32> to vector<8x128xf32>
    %cst_13 = arith.constant dense<0.000000e+00> : vector<8x128xf32>
    %22 = tpu.matmul %19, %6, %cst_13 {dimension_numbers = #tpu.dot_dimension_numbers<[1], [0], [0], [1], [0, 0, 1, 1], [], []>} : vector<8x32xf32>, vector<32x128xf32>, vector<8x128xf32> -> vector<8x128xf32>
    %23 = arith.addf %21, %22 : vector<8x128xf32>
    %24 = vector.broadcast %15 : vector<1x128xf32> to vector<8x128xf32>
    %25 = arith.mulf %23, %24 : vector<8x128xf32>
    %26 = math.tanh %25 : vector<8x128xf32>
    %27 = vector.broadcast %15 : vector<1x128xf32> to vector<8x128xf32>
    %28 = arith.mulf %26, %27 : vector<8x128xf32>
    %29 = vector.broadcast %18 : vector<1x128xf32> to vector<8x128xf32>
    %30 = arith.addf %28, %29 : vector<8x128xf32>
    %c64_i32_14 = arith.constant 64 : i32
    %31 = tpu.dynamic_rotate %30 by %c64_i32_14 dim 1 : vector<8x128xf32>, i32 -> vector<8x128xf32>
    %32 = arith.mulf %30, %31 : vector<8x128xf32>
    %33 = vector.extract_strided_slice %32 {offsets = [0, 0], sizes = [8, 32], strides = [1, 1]} : vector<8x128xf32> to vector<8x32xf32>
    %34 = vector.extract_strided_slice %30 {offsets = [0, 32], sizes = [8, 32], strides = [1, 1]} : vector<8x128xf32> to vector<8x32xf32>
    %35 = vector.extract_strided_slice %30 {offsets = [0, 96], sizes = [8, 32], strides = [1, 1]} : vector<8x128xf32> to vector<8x32xf32>
    %36 = arith.mulf %34, %20 : vector<8x32xf32>
    %37 = arith.addf %36, %33 : vector<8x32xf32>
    %38 = math.tanh %37 : vector<8x32xf32>
    %39 = arith.mulf %35, %38 : vector<8x32xf32>
    %40 = vector.extract_strided_slice %5 {offsets = [8, 0], sizes = [8, 128], strides = [1, 1]} : vector<64x128xf32> to vector<8x128xf32>
    %cst_15 = arith.constant dense<0.000000e+00> : vector<8x128xf32>
    %41 = tpu.matmul %39, %6, %cst_15 {dimension_numbers = #tpu.dot_dimension_numbers<[1], [0], [0], [1], [0, 0, 1, 1], [], []>} : vector<8x32xf32>, vector<32x128xf32>, vector<8x128xf32> -> vector<8x128xf32>
    %42 = arith.addf %40, %41 : vector<8x128xf32>
    %43 = vector.broadcast %15 : vector<1x128xf32> to vector<8x128xf32>
    %44 = arith.mulf %42, %43 : vector<8x128xf32>
    %45 = math.tanh %44 : vector<8x128xf32>
    %46 = vector.broadcast %15 : vector<1x128xf32> to vector<8x128xf32>
    %47 = arith.mulf %45, %46 : vector<8x128xf32>
    %48 = vector.broadcast %18 : vector<1x128xf32> to vector<8x128xf32>
    %49 = arith.addf %47, %48 : vector<8x128xf32>
    %c64_i32_16 = arith.constant 64 : i32
    %50 = tpu.dynamic_rotate %49 by %c64_i32_16 dim 1 : vector<8x128xf32>, i32 -> vector<8x128xf32>
    %51 = arith.mulf %49, %50 : vector<8x128xf32>
    %52 = vector.extract_strided_slice %51 {offsets = [0, 0], sizes = [8, 32], strides = [1, 1]} : vector<8x128xf32> to vector<8x32xf32>
    %53 = vector.extract_strided_slice %49 {offsets = [0, 32], sizes = [8, 32], strides = [1, 1]} : vector<8x128xf32> to vector<8x32xf32>
    %54 = vector.extract_strided_slice %49 {offsets = [0, 96], sizes = [8, 32], strides = [1, 1]} : vector<8x128xf32> to vector<8x32xf32>
    %55 = arith.mulf %53, %37 : vector<8x32xf32>
    %56 = arith.addf %55, %52 : vector<8x32xf32>
    %57 = math.tanh %56 : vector<8x32xf32>
    %58 = arith.mulf %54, %57 : vector<8x32xf32>
    %59 = vector.extract_strided_slice %5 {offsets = [16, 0], sizes = [8, 128], strides = [1, 1]} : vector<64x128xf32> to vector<8x128xf32>
    %cst_17 = arith.constant dense<0.000000e+00> : vector<8x128xf32>
    %60 = tpu.matmul %58, %6, %cst_17 {dimension_numbers = #tpu.dot_dimension_numbers<[1], [0], [0], [1], [0, 0, 1, 1], [], []>} : vector<8x32xf32>, vector<32x128xf32>, vector<8x128xf32> -> vector<8x128xf32>
    %61 = arith.addf %59, %60 : vector<8x128xf32>
    %62 = vector.broadcast %15 : vector<1x128xf32> to vector<8x128xf32>
    %63 = arith.mulf %61, %62 : vector<8x128xf32>
    %64 = math.tanh %63 : vector<8x128xf32>
    %65 = vector.broadcast %15 : vector<1x128xf32> to vector<8x128xf32>
    %66 = arith.mulf %64, %65 : vector<8x128xf32>
    %67 = vector.broadcast %18 : vector<1x128xf32> to vector<8x128xf32>
    %68 = arith.addf %66, %67 : vector<8x128xf32>
    %c64_i32_18 = arith.constant 64 : i32
    %69 = tpu.dynamic_rotate %68 by %c64_i32_18 dim 1 : vector<8x128xf32>, i32 -> vector<8x128xf32>
    %70 = arith.mulf %68, %69 : vector<8x128xf32>
    %71 = vector.extract_strided_slice %70 {offsets = [0, 0], sizes = [8, 32], strides = [1, 1]} : vector<8x128xf32> to vector<8x32xf32>
    %72 = vector.extract_strided_slice %68 {offsets = [0, 32], sizes = [8, 32], strides = [1, 1]} : vector<8x128xf32> to vector<8x32xf32>
    %73 = vector.extract_strided_slice %68 {offsets = [0, 96], sizes = [8, 32], strides = [1, 1]} : vector<8x128xf32> to vector<8x32xf32>
    %74 = arith.mulf %72, %56 : vector<8x32xf32>
    %75 = arith.addf %74, %71 : vector<8x32xf32>
    %76 = math.tanh %75 : vector<8x32xf32>
    %77 = arith.mulf %73, %76 : vector<8x32xf32>
    %78 = vector.extract_strided_slice %5 {offsets = [24, 0], sizes = [8, 128], strides = [1, 1]} : vector<64x128xf32> to vector<8x128xf32>
    %cst_19 = arith.constant dense<0.000000e+00> : vector<8x128xf32>
    %79 = tpu.matmul %77, %6, %cst_19 {dimension_numbers = #tpu.dot_dimension_numbers<[1], [0], [0], [1], [0, 0, 1, 1], [], []>} : vector<8x32xf32>, vector<32x128xf32>, vector<8x128xf32> -> vector<8x128xf32>
    %80 = arith.addf %78, %79 : vector<8x128xf32>
    %81 = vector.broadcast %15 : vector<1x128xf32> to vector<8x128xf32>
    %82 = arith.mulf %80, %81 : vector<8x128xf32>
    %83 = math.tanh %82 : vector<8x128xf32>
    %84 = vector.broadcast %15 : vector<1x128xf32> to vector<8x128xf32>
    %85 = arith.mulf %83, %84 : vector<8x128xf32>
    %86 = vector.broadcast %18 : vector<1x128xf32> to vector<8x128xf32>
    %87 = arith.addf %85, %86 : vector<8x128xf32>
    %c64_i32_20 = arith.constant 64 : i32
    %88 = tpu.dynamic_rotate %87 by %c64_i32_20 dim 1 : vector<8x128xf32>, i32 -> vector<8x128xf32>
    %89 = arith.mulf %87, %88 : vector<8x128xf32>
    %90 = vector.extract_strided_slice %89 {offsets = [0, 0], sizes = [8, 32], strides = [1, 1]} : vector<8x128xf32> to vector<8x32xf32>
    %91 = vector.extract_strided_slice %87 {offsets = [0, 32], sizes = [8, 32], strides = [1, 1]} : vector<8x128xf32> to vector<8x32xf32>
    %92 = vector.extract_strided_slice %87 {offsets = [0, 96], sizes = [8, 32], strides = [1, 1]} : vector<8x128xf32> to vector<8x32xf32>
    %93 = arith.mulf %91, %75 : vector<8x32xf32>
    %94 = arith.addf %93, %90 : vector<8x32xf32>
    %95 = math.tanh %94 : vector<8x32xf32>
    %96 = arith.mulf %92, %95 : vector<8x32xf32>
    %97 = vector.extract_strided_slice %5 {offsets = [32, 0], sizes = [8, 128], strides = [1, 1]} : vector<64x128xf32> to vector<8x128xf32>
    %cst_21 = arith.constant dense<0.000000e+00> : vector<8x128xf32>
    %98 = tpu.matmul %96, %6, %cst_21 {dimension_numbers = #tpu.dot_dimension_numbers<[1], [0], [0], [1], [0, 0, 1, 1], [], []>} : vector<8x32xf32>, vector<32x128xf32>, vector<8x128xf32> -> vector<8x128xf32>
    %99 = arith.addf %97, %98 : vector<8x128xf32>
    %100 = vector.broadcast %15 : vector<1x128xf32> to vector<8x128xf32>
    %101 = arith.mulf %99, %100 : vector<8x128xf32>
    %102 = math.tanh %101 : vector<8x128xf32>
    %103 = vector.broadcast %15 : vector<1x128xf32> to vector<8x128xf32>
    %104 = arith.mulf %102, %103 : vector<8x128xf32>
    %105 = vector.broadcast %18 : vector<1x128xf32> to vector<8x128xf32>
    %106 = arith.addf %104, %105 : vector<8x128xf32>
    %c64_i32_22 = arith.constant 64 : i32
    %107 = tpu.dynamic_rotate %106 by %c64_i32_22 dim 1 : vector<8x128xf32>, i32 -> vector<8x128xf32>
    %108 = arith.mulf %106, %107 : vector<8x128xf32>
    %109 = vector.extract_strided_slice %108 {offsets = [0, 0], sizes = [8, 32], strides = [1, 1]} : vector<8x128xf32> to vector<8x32xf32>
    %110 = vector.extract_strided_slice %106 {offsets = [0, 32], sizes = [8, 32], strides = [1, 1]} : vector<8x128xf32> to vector<8x32xf32>
    %111 = vector.extract_strided_slice %106 {offsets = [0, 96], sizes = [8, 32], strides = [1, 1]} : vector<8x128xf32> to vector<8x32xf32>
    %112 = arith.mulf %110, %94 : vector<8x32xf32>
    %113 = arith.addf %112, %109 : vector<8x32xf32>
    %114 = math.tanh %113 : vector<8x32xf32>
    %115 = arith.mulf %111, %114 : vector<8x32xf32>
    %116 = vector.extract_strided_slice %5 {offsets = [40, 0], sizes = [8, 128], strides = [1, 1]} : vector<64x128xf32> to vector<8x128xf32>
    %cst_23 = arith.constant dense<0.000000e+00> : vector<8x128xf32>
    %117 = tpu.matmul %115, %6, %cst_23 {dimension_numbers = #tpu.dot_dimension_numbers<[1], [0], [0], [1], [0, 0, 1, 1], [], []>} : vector<8x32xf32>, vector<32x128xf32>, vector<8x128xf32> -> vector<8x128xf32>
    %118 = arith.addf %116, %117 : vector<8x128xf32>
    %119 = vector.broadcast %15 : vector<1x128xf32> to vector<8x128xf32>
    %120 = arith.mulf %118, %119 : vector<8x128xf32>
    %121 = math.tanh %120 : vector<8x128xf32>
    %122 = vector.broadcast %15 : vector<1x128xf32> to vector<8x128xf32>
    %123 = arith.mulf %121, %122 : vector<8x128xf32>
    %124 = vector.broadcast %18 : vector<1x128xf32> to vector<8x128xf32>
    %125 = arith.addf %123, %124 : vector<8x128xf32>
    %c64_i32_24 = arith.constant 64 : i32
    %126 = tpu.dynamic_rotate %125 by %c64_i32_24 dim 1 : vector<8x128xf32>, i32 -> vector<8x128xf32>
    %127 = arith.mulf %125, %126 : vector<8x128xf32>
    %128 = vector.extract_strided_slice %127 {offsets = [0, 0], sizes = [8, 32], strides = [1, 1]} : vector<8x128xf32> to vector<8x32xf32>
    %129 = vector.extract_strided_slice %125 {offsets = [0, 32], sizes = [8, 32], strides = [1, 1]} : vector<8x128xf32> to vector<8x32xf32>
    %130 = vector.extract_strided_slice %125 {offsets = [0, 96], sizes = [8, 32], strides = [1, 1]} : vector<8x128xf32> to vector<8x32xf32>
    %131 = arith.mulf %129, %113 : vector<8x32xf32>
    %132 = arith.addf %131, %128 : vector<8x32xf32>
    %133 = math.tanh %132 : vector<8x32xf32>
    %134 = arith.mulf %130, %133 : vector<8x32xf32>
    %135 = vector.extract_strided_slice %5 {offsets = [48, 0], sizes = [8, 128], strides = [1, 1]} : vector<64x128xf32> to vector<8x128xf32>
    %cst_25 = arith.constant dense<0.000000e+00> : vector<8x128xf32>
    %136 = tpu.matmul %134, %6, %cst_25 {dimension_numbers = #tpu.dot_dimension_numbers<[1], [0], [0], [1], [0, 0, 1, 1], [], []>} : vector<8x32xf32>, vector<32x128xf32>, vector<8x128xf32> -> vector<8x128xf32>
    %137 = arith.addf %135, %136 : vector<8x128xf32>
    %138 = vector.broadcast %15 : vector<1x128xf32> to vector<8x128xf32>
    %139 = arith.mulf %137, %138 : vector<8x128xf32>
    %140 = math.tanh %139 : vector<8x128xf32>
    %141 = vector.broadcast %15 : vector<1x128xf32> to vector<8x128xf32>
    %142 = arith.mulf %140, %141 : vector<8x128xf32>
    %143 = vector.broadcast %18 : vector<1x128xf32> to vector<8x128xf32>
    %144 = arith.addf %142, %143 : vector<8x128xf32>
    %c64_i32_26 = arith.constant 64 : i32
    %145 = tpu.dynamic_rotate %144 by %c64_i32_26 dim 1 : vector<8x128xf32>, i32 -> vector<8x128xf32>
    %146 = arith.mulf %144, %145 : vector<8x128xf32>
    %147 = vector.extract_strided_slice %146 {offsets = [0, 0], sizes = [8, 32], strides = [1, 1]} : vector<8x128xf32> to vector<8x32xf32>
    %148 = vector.extract_strided_slice %144 {offsets = [0, 32], sizes = [8, 32], strides = [1, 1]} : vector<8x128xf32> to vector<8x32xf32>
    %149 = vector.extract_strided_slice %144 {offsets = [0, 96], sizes = [8, 32], strides = [1, 1]} : vector<8x128xf32> to vector<8x32xf32>
    %150 = arith.mulf %148, %132 : vector<8x32xf32>
    %151 = arith.addf %150, %147 : vector<8x32xf32>
    %152 = math.tanh %151 : vector<8x32xf32>
    %153 = arith.mulf %149, %152 : vector<8x32xf32>
    %154 = vector.extract_strided_slice %5 {offsets = [56, 0], sizes = [8, 128], strides = [1, 1]} : vector<64x128xf32> to vector<8x128xf32>
    %cst_27 = arith.constant dense<0.000000e+00> : vector<8x128xf32>
    %155 = tpu.matmul %153, %6, %cst_27 {dimension_numbers = #tpu.dot_dimension_numbers<[1], [0], [0], [1], [0, 0, 1, 1], [], []>} : vector<8x32xf32>, vector<32x128xf32>, vector<8x128xf32> -> vector<8x128xf32>
    %156 = arith.addf %154, %155 : vector<8x128xf32>
    %157 = vector.broadcast %15 : vector<1x128xf32> to vector<8x128xf32>
    %158 = arith.mulf %156, %157 : vector<8x128xf32>
    %159 = math.tanh %158 : vector<8x128xf32>
    %160 = vector.broadcast %15 : vector<1x128xf32> to vector<8x128xf32>
    %161 = arith.mulf %159, %160 : vector<8x128xf32>
    %162 = vector.broadcast %18 : vector<1x128xf32> to vector<8x128xf32>
    %163 = arith.addf %161, %162 : vector<8x128xf32>
    %c64_i32_28 = arith.constant 64 : i32
    %164 = tpu.dynamic_rotate %163 by %c64_i32_28 dim 1 : vector<8x128xf32>, i32 -> vector<8x128xf32>
    %165 = arith.mulf %163, %164 : vector<8x128xf32>
    %166 = vector.extract_strided_slice %165 {offsets = [0, 0], sizes = [8, 32], strides = [1, 1]} : vector<8x128xf32> to vector<8x32xf32>
    %167 = vector.extract_strided_slice %163 {offsets = [0, 32], sizes = [8, 32], strides = [1, 1]} : vector<8x128xf32> to vector<8x32xf32>
    %168 = vector.extract_strided_slice %163 {offsets = [0, 96], sizes = [8, 32], strides = [1, 1]} : vector<8x128xf32> to vector<8x32xf32>
    %169 = arith.mulf %167, %151 : vector<8x32xf32>
    %170 = arith.addf %169, %166 : vector<8x32xf32>
    %171 = math.tanh %170 : vector<8x32xf32>
    %172 = arith.mulf %168, %171 : vector<8x32xf32>
    %c0_29 = arith.constant 0 : index
    %c0_30 = arith.constant 0 : index
    %173 = vector.load %arg4[%c0_29, %c0_30] : memref<32x4xf32, #tpu.memory_space<vmem>>, vector<32x4xf32>
    %cst_31 = arith.constant dense<0.000000e+00> : vector<8x4xf32>
    %174 = tpu.matmul %172, %173, %cst_31 {dimension_numbers = #tpu.dot_dimension_numbers<[1], [0], [0], [1], [0, 0, 1, 1], [], []>} : vector<8x32xf32>, vector<32x4xf32>, vector<8x4xf32> -> vector<8x4xf32>
    %c0_32 = arith.constant 0 : index
    %c0_33 = arith.constant 0 : index
    %175 = vector.load %arg5[%c0_32, %c0_33] : memref<1x4xf32, #tpu.memory_space<vmem>>, vector<1x4xf32>
    %176 = vector.broadcast %175 : vector<1x4xf32> to vector<8x4xf32>
    %177 = arith.addf %174, %176 : vector<8x4xf32>
    %c0_34 = arith.constant 0 : index
    %c0_35 = arith.constant 0 : index
    %178 = vector.load %arg6[%c0_34, %c0_35] : memref<8x4xf32, #tpu.memory_space<vmem>>, vector<8x4xf32>
    tpu.vector_store %arg6[%c0_34, %c0_35], %177 {strides = array<i32>} : memref<8x4xf32, #tpu.memory_space<vmem>>, vector<8x4xf32>,
    return
  }
}

</mosaic_0001>

<llo_original>
// kernel: lstm_model_forward.1
$region0: #{lstm_model_forward.1}
  #allocation0 [shape = 'u32[]', space=smem, size = 0x4, offset = 0x4, fixed_abs, tag = 'smem constant byte address 0x4 - core index']
  #allocation1 [shape = 'u32[144,128]{1,0:T(1,128)}', space=vmem, size = 0x12000, scoped, tag = 'internal scratch']
  %s0 = inlined_call_operand.vmem [shape: f32[64,4], index: 0, kind: input, shape index: {}]
  %s1 = inlined_call_operand.vmem [shape: f32[4,128], index: 1, kind: input, shape index: {}]
  %s2 = inlined_call_operand.vmem [shape: f32[32,128], index: 2, kind: input, shape index: {}]
  %s3 = inlined_call_operand.vmem [shape: f32[1,128], index: 3, kind: input, shape index: {}]
  %s4 = inlined_call_operand.vmem [shape: f32[32,4], index: 4, kind: input, shape index: {}]
  %s5 = inlined_call_operand.vmem [shape: f32[1,4], index: 5, kind: input, shape index: {}]
  %s6 = inlined_call_operand.vmem [shape: f32[8,4], index: 6, kind: output, shape index: {}]
  %s7 = sld [smem:[#allocation0]]
  $region34: #{lstm_model_forward.1} parent=0
    _
  %s9 = ssub.s32 1, %s7
  %s10 = scalar_select 0, %s9, %s7
  // Predicated region
  $region2: #{lstm_model_forward.1} parent=0 // pred_check
    _
  $region3: #{lstm_model_forward.1} parent=0 // pred_check_branch
    %12 = sbr.rel (0) target = $region5
  $region4: #{lstm_model_forward.1} parent=0 // pred_region
    _
  $region5: #{lstm_model_forward.1} parent=0 // pred_fallthru
    _
  // Predicated region
  $region6: #{lstm_model_forward.1} parent=0 // pred_check
    _
  $region7: #{lstm_model_forward.1} parent=0 // pred_check_branch
    %14 = sbr.rel (0) target = $region9
  $region8: #{lstm_model_forward.1} parent=0 // pred_region
    _
  $region9: #{lstm_model_forward.1} parent=0 // pred_fallthru
    _
  // Predicated region
  $region10: #{lstm_model_forward.1} parent=0 // pred_check
    _
  $region11: #{lstm_model_forward.1} parent=0 // pred_check_branch
    %16 = sbr.rel (0) target = $region13
  $region12: #{lstm_model_forward.1} parent=0 // pred_region
    _
  $region13: #{lstm_model_forward.1} parent=0 // pred_fallthru
    _
  // Predicated region
  $region14: #{lstm_model_forward.1} parent=0 // pred_check
    _
  $region15: #{lstm_model_forward.1} parent=0 // pred_check_branch
    %18 = sbr.rel (0) target = $region17
  $region16: #{lstm_model_forward.1} parent=0 // pred_region
    _
  $region17: #{lstm_model_forward.1} parent=0 // pred_fallthru
    _
  // Predicated region
  $region18: #{lstm_model_forward.1} parent=0 // pred_check
    _
  $region19: #{lstm_model_forward.1} parent=0 // pred_check_branch
    %20 = sbr.rel (0) target = $region21
  $region20: #{lstm_model_forward.1} parent=0 // pred_region
    _
  $region21: #{lstm_model_forward.1} parent=0 // pred_fallthru
    _
  // Predicated region
  $region22: #{lstm_model_forward.1} parent=0 // pred_check
    _
  $region23: #{lstm_model_forward.1} parent=0 // pred_check_branch
    %22 = sbr.rel (0) target = $region25
  $region24: #{lstm_model_forward.1} parent=0 // pred_region
    _
  $region25: #{lstm_model_forward.1} parent=0 // pred_fallthru
    _
  %v23 = vld [vmem:[%s0] sm:$0xff]
  %v24 = vld [vmem:[%s0 + $0x8] sm:$0xff]
  %v25 = vld [vmem:[%s0 + $0x10] sm:$0xff]
  %v26 = vld [vmem:[%s0 + $0x18] sm:$0xff]
  %v27 = vld [vmem:[%s0 + $0x20] sm:$0xff]
  %v28 = vld [vmem:[%s0 + $0x28] sm:$0xff]
  %v29 = vld [vmem:[%s0 + $0x30] sm:$0xff]
  %v30 = vld [vmem:[%s0 + $0x38] sm:$0xff]
  %v31 = vld [vmem:[%s1] sm:$0xf]
  %v32 = vld [vmem:[%s3] sm:$0x1]
  %v34 = vlaneseq
  %v35 = vshrl.u32 %v34, 7
  %v36 = vsub.s32 0, %v35
  %v37 = vrot.slane %v32, %v36
  %vm39 = vcmask 31744
  %v41 = vsel %vm39, %v23, 0
  %v44 = vsel %vm39, %v24, 0
  %v47 = vsel %vm39, %v25, 0
  %v50 = vsel %vm39, %v26, 0
  %v53 = vsel %vm39, %v27, 0
  %v56 = vsel %vm39, %v28, 0
  %v59 = vsel %vm39, %v29, 0
  %v62 = vsel %vm39, %v30, 0
  %vm64 = vcmask 1043456
  %v66 = vsel %vm64, %v31, 0
  %68 = vmatprep.subr.mxu0 0.0
  %69 = vmatpush1.msra.mxu0 %v66
  %70 = vmatprep.subr.mxu0 0.0
  %71 = vmatpush1.msra.mxu0 0.0
  %72 = vmatprep.subr.mxu0 0.0
  %73 = vmatpush1.msra.mxu0 0.0
  %74 = vmatprep.subr.mxu0 0.0
  %75 = vmatpush1.msra.mxu0 0.0
  %76 = vmatprep.subr.mxu0 0.0
  %77 = vmatpush1.msra.mxu0 0.0
  %78 = vmatprep.subr.mxu0 0.0
  %79 = vmatpush1.msra.mxu0 0.0
  %80 = vmatprep.subr.mxu0 0.0
  %81 = vmatpush1.msra.mxu0 0.0
  %82 = vmatprep.subr.mxu0 0.0
  %83 = vmatpush1.msra.mxu0 0.0
  %84 = vmatprep.subr.mxu0 0.0
  %85 = vmatpush1.msra.mxu0 0.0
  %86 = vmatprep.subr.mxu0 0.0
  %87 = vmatpush1.msra.mxu0 0.0
  %88 = vmatprep.subr.mxu0 0.0
  %89 = vmatpush1.msra.mxu0 0.0
  %90 = vmatprep.subr.mxu0 0.0
  %91 = vmatpush1.msra.mxu0 0.0
  %92 = vmatprep.subr.mxu0 0.0
  %93 = vmatpush1.msra.mxu0 0.0
  %94 = vmatprep.subr.mxu0 0.0
  %95 = vmatpush1.msra.mxu0 0.0
  %96 = vmatprep.subr.mxu0 0.0
  %97 = vmatpush1.msra.mxu0 0.0
  %98 = vmatprep.subr.mxu0 0.0
  %99 = vmatpush1.msra.mxu0 0.0
  %100 = vmatprep.subr.mxu0 0.0
  %101 = vmatpush1.msra.mxu0 0.0
  %102 = vmatprep.subr.mxu0 0.0
  %103 = vmatpush1.msra.mxu0 0.0
  %104 = vmatprep.subr.mxu0 0.0
  %105 = vmatpush1.msra.mxu0 0.0
  %106 = vmatprep.subr.mxu0 0.0
  %107 = vmatpush1.msra.mxu0 0.0
  %108 = vmatprep.subr.mxu0 0.0
  %109 = vmatpush1.msra.mxu0 0.0
  %110 = vmatprep.subr.mxu0 0.0
  %111 = vmatpush1.msra.mxu0 0.0
  %112 = vmatprep.subr.mxu0 0.0
  %113 = vmatpush1.msra.mxu0 0.0
  %114 = vmatprep.subr.mxu0 0.0
  %115 = vmatpush1.msra.mxu0 0.0
  %116 = vmatprep.subr.mxu0 0.0
  %117 = vmatpush1.msra.mxu0 0.0
  %118 = vmatprep.subr.mxu0 0.0
  %119 = vmatpush1.msra.mxu0 0.0
  %120 = vmatprep.subr.mxu0 0.0
  %121 = vmatpush1.msra.mxu0 0.0
  %122 = vmatprep.subr.mxu0 0.0
  %123 = vmatpush1.msra.mxu0 0.0
  %124 = vmatprep.subr.mxu0 0.0
  %125 = vmatpush1.msra.mxu0 0.0
  %126 = vmatprep.subr.mxu0 0.0
  %127 = vmatpush1.msra.mxu0 0.0
  %128 = vmatprep.subr.mxu0 0.0
  %129 = vmatpush1.msra.mxu0 0.0
  %130 = vmatprep.subr.mxu0 0.0
  %131 = vmatpush1.msra.mxu0 0.0
  %132 = vmatprep.mubr.f32.mxu0 0.0
  %133 = vmatmul.mubr.f32.gmra.mrb[0].mxu0 %v41
  %v134 = vpop.f32.mrb[0].mxu0
  %v135 = vadd.f32 %v37, %v134
  %v136 = vpop.f32.mrb[0].mxu0
  %137 = vmatprep.mubr.f32.mxu0 0.0
  %138 = vmatmul.mubr.f32.gmra.mrb[0].mxu0 %v44
  %v139 = vpop.f32.mrb[0].mxu0
  %v140 = vadd.f32 %v37, %v139
  %v141 = vpop.f32.mrb[0].mxu0
  %142 = vmatprep.mubr.f32.mxu0 0.0
  %143 = vmatmul.mubr.f32.gmra.mrb[0].mxu0 %v47
  %v144 = vpop.f32.mrb[0].mxu0
  %v145 = vadd.f32 %v37, %v144
  %v146 = vpop.f32.mrb[0].mxu0
  %147 = vmatprep.mubr.f32.mxu0 0.0
  %148 = vmatmul.mubr.f32.gmra.mrb[0].mxu0 %v50
  %v149 = vpop.f32.mrb[0].mxu0
  %v150 = vadd.f32 %v37, %v149
  %v151 = vpop.f32.mrb[0].mxu0
  %152 = vmatprep.mubr.f32.mxu0 0.0
  %153 = vmatmul.mubr.f32.gmra.mrb[0].mxu0 %v53
  %v154 = vpop.f32.mrb[0].mxu0
  %v155 = vadd.f32 %v37, %v154
  %v156 = vpop.f32.mrb[0].mxu0
  %157 = vmatprep.mubr.f32.mxu0 0.0
  %158 = vmatmul.mubr.f32.gmra.mrb[0].mxu0 %v56
  %v159 = vpop.f32.mrb[0].mxu0
  %v160 = vadd.f32 %v37, %v159
  %v161 = vpop.f32.mrb[0].mxu0
  %162 = vmatprep.mubr.f32.mxu0 0.0
  %163 = vmatmul.mubr.f32.gmra.mrb[0].mxu0 %v59
  %v164 = vpop.f32.mrb[0].mxu0
  %v165 = vadd.f32 %v37, %v164
  %v166 = vpop.f32.mrb[0].mxu0
  %167 = vmatprep.mubr.f32.mxu0 0.0
  %168 = vmatmul.mubr.f32.gmra.mrb[0].mxu0 %v62
  %v169 = vpop.f32.mrb[0].mxu0
  %v170 = vadd.f32 %v37, %v169
  %v171 = vpop.f32.mrb[0].mxu0
  %172 = vdwg.mxu0
  %v173 = vld [vmem:[%s2] sm:$0xff]
  %v174 = vld [vmem:[%s2 + $0x8] sm:$0xff]
  %v175 = vld [vmem:[%s2 + $0x10] sm:$0xff]
  %v176 = vld [vmem:[%s2 + $0x18] sm:$0xff]
  %v177 = vlaneseq
  %v178 = vand.u32 %v177, 127
  %vm179 = vcmp.ge.s32.totalorder %v178, 64
  %vm180 = vcmp.lt.s32.totalorder %v178, 96
  %vm181 = vmand %vm179, %vm180
  %v182 = vsel %vm181, 1.0, 0.5
  %v183 = vsel %vm181, 0.0, 0.5
  %vm184 = vcmask 261120
  %v186 = vsel %vm184, 0.0, 0
  %188 = vmatprep.subr.mxu0 0.0
  %189 = vmatpush1.msra.mxu0 %v173
  %190 = vmatprep.subr.mxu0 0.0
  %191 = vmatpush1.msra.mxu0 %v174
  %192 = vmatprep.subr.mxu0 0.0
  %193 = vmatpush1.msra.mxu0 %v175
  %194 = vmatprep.subr.mxu0 0.0
  %195 = vmatpush1.msra.mxu0 %v176
  %196 = vmatprep.subr.mxu0 0.0
  %197 = vmatpush1.msra.mxu0 0.0
  %198 = vmatprep.subr.mxu0 0.0
  %199 = vmatpush1.msra.mxu0 0.0
  %200 = vmatprep.subr.mxu0 0.0
  %201 = vmatpush1.msra.mxu0 0.0
  %202 = vmatprep.subr.mxu0 0.0
  %203 = vmatpush1.msra.mxu0 0.0
  %204 = vmatprep.subr.mxu0 0.0
  %205 = vmatpush1.msra.mxu0 0.0
  %206 = vmatprep.subr.mxu0 0.0
  %207 = vmatpush1.msra.mxu0 0.0
  %208 = vmatprep.subr.mxu0 0.0
  %209 = vmatpush1.msra.mxu0 0.0
  %210 = vmatprep.subr.mxu0 0.0
  %211 = vmatpush1.msra.mxu0 0.0
  %212 = vmatprep.subr.mxu0 0.0
  %213 = vmatpush1.msra.mxu0 0.0
  %214 = vmatprep.subr.mxu0 0.0
  %215 = vmatpush1.msra.mxu0 0.0
  %216 = vmatprep.subr.mxu0 0.0
  %217 = vmatpush1.msra.mxu0 0.0
  %218 = vmatprep.subr.mxu0 0.0
  %219 = vmatpush1.msra.mxu0 0.0
  %220 = vmatprep.subr.mxu0 0.0
  %221 = vmatpush1.msra.mxu0 0.0
  %222 = vmatprep.subr.mxu0 0.0
  %223 = vmatpush1.msra.mxu0 0.0
  %224 = vmatprep.subr.mxu0 0.0
  %225 = vmatpush1.msra.mxu0 0.0
  %226 = vmatprep.subr.mxu0 0.0
  %227 = vmatpush1.msra.mxu0 0.0
  %228 = vmatprep.subr.mxu0 0.0
  %229 = vmatpush1.msra.mxu0 0.0
  %230 = vmatprep.subr.mxu0 0.0
  %231 = vmatpush1.msra.mxu0 0.0
  %232 = vmatprep.subr.mxu0 0.0
  %233 = vmatpush1.msra.mxu0 0.0
  %234 = vmatprep.subr.mxu0 0.0
  %235 = vmatpush1.msra.mxu0 0.0
  %236 = vmatprep.subr.mxu0 0.0
  %237 = vmatpush1.msra.mxu0 0.0
  %238 = vmatprep.subr.mxu0 0.0
  %239 = vmatpush1.msra.mxu0 0.0
  %240 = vmatprep.subr.mxu0 0.0
  %241 = vmatpush1.msra.mxu0 0.0
  %242 = vmatprep.subr.mxu0 0.0
  %243 = vmatpush1.msra.mxu0 0.0
  %244 = vmatprep.subr.mxu0 0.0
  %245 = vmatpush1.msra.mxu0 0.0
  %246 = vmatprep.subr.mxu0 0.0
  %247 = vmatpush1.msra.mxu0 0.0
  %248 = vmatprep.subr.mxu0 0.0
  %249 = vmatpush1.msra.mxu0 0.0
  %250 = vmatprep.subr.mxu0 0.0
  %251 = vmatpush1.msra.mxu0 0.0
  %252 = vmatprep.mubr.f32.mxu0 0.0
  %253 = vmatmul.mubr.f32.gmra.mrb[0].mxu0 %v186
  %v254 = vpop.f32.mrb[0].mxu0
  %v255 = vadd.f32 0.0, %v254
  %v256 = vpop.f32.mrb[0].mxu0
  %257 = vdwg.mxu0
  %v258 = vadd.f32 %v135, %v255
  %v259 = vmul.f32 %v258, %v182
  %v260 = vtanh.pop %v259
  %v261 = vmul.f32 %v260, %v182
  %v262 = vadd.f32 %v261, %v183
  %263 = vrot.lane.b32.xlu0 %v262, 64
  %v264 = vpop.permute.xlu0 %263
  %v265 = vmul.f32 %v262, %v264
  %v266 = vmul.f32 %v262, 0.0
  %268 = vrot.lane.b32.xlu0 %v265, 32
  %v269 = vpop.permute.xlu0 %268
  %v271 = vadd.f32 %v266, %v269
  %v272 = vtanh.pop %v271
  %274 = vrot.lane.b32.xlu0 %v272, 64
  %v275 = vpop.permute.xlu0 %274
  %v277 = vmul.f32 %v262, %v275
  %279 = vrot.lane.b32.xlu0 %v277, 32
  %v280 = vpop.permute.xlu0 %279
  %v281 = vsel %vm184, %v280, 0
  %283 = vmatprep.subr.mxu0 0.0
  %284 = vmatpush1.msra.mxu0 %v173
  %285 = vmatprep.subr.mxu0 0.0
  %286 = vmatpush1.msra.mxu0 %v174
  %287 = vmatprep.subr.mxu0 0.0
  %288 = vmatpush1.msra.mxu0 %v175
  %289 = vmatprep.subr.mxu0 0.0
  %290 = vmatpush1.msra.mxu0 %v176
  %291 = vmatprep.subr.mxu0 0.0
  %292 = vmatpush1.msra.mxu0 0.0
  %293 = vmatprep.subr.mxu0 0.0
  %294 = vmatpush1.msra.mxu0 0.0
  %295 = vmatprep.subr.mxu0 0.0
  %296 = vmatpush1.msra.mxu0 0.0
  %297 = vmatprep.subr.mxu0 0.0
  %298 = vmatpush1.msra.mxu0 0.0
  %299 = vmatprep.subr.mxu0 0.0
  %300 = vmatpush1.msra.mxu0 0.0
  %301 = vmatprep.subr.mxu0 0.0
  %302 = vmatpush1.msra.mxu0 0.0
  %303 = vmatprep.subr.mxu0 0.0
  %304 = vmatpush1.msra.mxu0 0.0
  %305 = vmatprep.subr.mxu0 0.0
  %306 = vmatpush1.msra.mxu0 0.0
  %307 = vmatprep.subr.mxu0 0.0
  %308 = vmatpush1.msra.mxu0 0.0
  %309 = vmatprep.subr.mxu0 0.0
  %310 = vmatpush1.msra.mxu0 0.0
  %311 = vmatprep.subr.mxu0 0.0
  %312 = vmatpush1.msra.mxu0 0.0
  %313 = vmatprep.subr.mxu0 0.0
  %314 = vmatpush1.msra.mxu0 0.0
  %315 = vmatprep.subr.mxu0 0.0
  %316 = vmatpush1.msra.mxu0 0.0
  %317 = vmatprep.subr.mxu0 0.0
  %318 = vmatpush1.msra.mxu0 0.0
  %319 = vmatprep.subr.mxu0 0.0
  %320 = vmatpush1.msra.mxu0 0.0
  %321 = vmatprep.subr.mxu0 0.0
  %322 = vmatpush1.msra.mxu0 0.0
  %323 = vmatprep.subr.mxu0 0.0
  %324 = vmatpush1.msra.mxu0 0.0
  %325 = vmatprep.subr.mxu0 0.0
  %326 = vmatpush1.msra.mxu0 0.0
  %327 = vmatprep.subr.mxu0 0.0
  %328 = vmatpush1.msra.mxu0 0.0
  %329 = vmatprep.subr.mxu0 0.0
  %330 = vmatpush1.msra.mxu0 0.0
  %331 = vmatprep.subr.mxu0 0.0
  %332 = vmatpush1.msra.mxu0 0.0
  %333 = vmatprep.subr.mxu0 0.0
  %334 = vmatpush1.msra.mxu0 0.0
  %335 = vmatprep.subr.mxu0 0.0
  %336 = vmatpush1.msra.mxu0 0.0
  %337 = vmatprep.subr.mxu0 0.0
  %338 = vmatpush1.msra.mxu0 0.0
  %339 = vmatprep.subr.mxu0 0.0
  %340 = vmatpush1.msra.mxu0 0.0
  %341 = vmatprep.subr.mxu0 0.0
  %342 = vmatpush1.msra.mxu0 0.0
  %343 = vmatprep.subr.mxu0 0.0
  %344 = vmatpush1.msra.mxu0 0.0
  %345 = vmatprep.subr.mxu0 0.0
  %346 = vmatpush1.msra.mxu0 0.0
  %347 = vmatprep.mubr.f32.mxu0 0.0
  %348 = vmatmul.mubr.f32.gmra.mrb[0].mxu0 %v281
  %v349 = vpop.f32.mrb[0].mxu0
  %v350 = vadd.f32 0.0, %v349
  %v351 = vpop.f32.mrb[0].mxu0
  %352 = vdwg.mxu0
  %v353 = vadd.f32 %v140, %v350
  %v354 = vmul.f32 %v353, %v182
  %v355 = vtanh.pop %v354
  %v356 = vmul.f32 %v355, %v182
  %v357 = vadd.f32 %v356, %v183
  %358 = vrot.lane.b32.xlu0 %v357, 64
  %v359 = vpop.permute.xlu0 %358
  %v360 = vmul.f32 %v357, %v359
  %v361 = vmul.f32 %v357, %v271
  %363 = vrot.lane.b32.xlu0 %v360, 32
  %v364 = vpop.permute.xlu0 %363
  %v366 = vadd.f32 %v361, %v364
  %v367 = vtanh.pop %v366
  %369 = vrot.lane.b32.xlu0 %v367, 64
  %v370 = vpop.permute.xlu0 %369
  %v372 = vmul.f32 %v357, %v370
  %374 = vrot.lane.b32.xlu0 %v372, 32
  %v375 = vpop.permute.xlu0 %374
  %v376 = vsel %vm184, %v375, 0
  %378 = vmatprep.subr.mxu0 0.0
  %379 = vmatpush1.msra.mxu0 %v173
  %380 = vmatprep.subr.mxu0 0.0
  %381 = vmatpush1.msra.mxu0 %v174
  %382 = vmatprep.subr.mxu0 0.0
  %383 = vmatpush1.msra.mxu0 %v175
  %384 = vmatprep.subr.mxu0 0.0
  %385 = vmatpush1.msra.mxu0 %v176
  %386 = vmatprep.subr.mxu0 0.0
  %387 = vmatpush1.msra.mxu0 0.0
  %388 = vmatprep.subr.mxu0 0.0
  %389 = vmatpush1.msra.mxu0 0.0
  %390 = vmatprep.subr.mxu0 0.0
  %391 = vmatpush1.msra.mxu0 0.0
  %392 = vmatprep.subr.mxu0 0.0
  %393 = vmatpush1.msra.mxu0 0.0
  %394 = vmatprep.subr.mxu0 0.0
  %395 = vmatpush1.msra.mxu0 0.0
  %396 = vmatprep.subr.mxu0 0.0
  %397 = vmatpush1.msra.mxu0 0.0
  %398 = vmatprep.subr.mxu0 0.0
  %399 = vmatpush1.msra.mxu0 0.0
  %400 = vmatprep.subr.mxu0 0.0
  %401 = vmatpush1.msra.mxu0 0.0
  %402 = vmatprep.subr.mxu0 0.0
  %403 = vmatpush1.msra.mxu0 0.0
  %404 = vmatprep.subr.mxu0 0.0
  %405 = vmatpush1.msra.mxu0 0.0
  %406 = vmatprep.subr.mxu0 0.0
  %407 = vmatpush1.msra.mxu0 0.0
  %408 = vmatprep.subr.mxu0 0.0
  %409 = vmatpush1.msra.mxu0 0.0
  %410 = vmatprep.subr.mxu0 0.0
  %411 = vmatpush1.msra.mxu0 0.0
  %412 = vmatprep.subr.mxu0 0.0
  %413 = vmatpush1.msra.mxu0 0.0
  %414 = vmatprep.subr.mxu0 0.0
  %415 = vmatpush1.msra.mxu0 0.0
  %416 = vmatprep.subr.mxu0 0.0
  %417 = vmatpush1.msra.mxu0 0.0
  %418 = vmatprep.subr.mxu0 0.0
  %419 = vmatpush1.msra.mxu0 0.0
  %420 = vmatprep.subr.mxu0 0.0
  %421 = vmatpush1.msra.mxu0 0.0
  %422 = vmatprep.subr.mxu0 0.0
  %423 = vmatpush1.msra.mxu0 0.0
  %424 = vmatprep.subr.mxu0 0.0
  %425 = vmatpush1.msra.mxu0 0.0
  %426 = vmatprep.subr.mxu0 0.0
  %427 = vmatpush1.msra.mxu0 0.0
  %428 = vmatprep.subr.mxu0 0.0
  %429 = vmatpush1.msra.mxu0 0.0
  %430 = vmatprep.subr.mxu0 0.0
  %431 = vmatpush1.msra.mxu0 0.0
  %432 = vmatprep.subr.mxu0 0.0
  %433 = vmatpush1.msra.mxu0 0.0
  %434 = vmatprep.subr.mxu0 0.0
  %435 = vmatpush1.msra.mxu0 0.0
  %436 = vmatprep.subr.mxu0 0.0
  %437 = vmatpush1.msra.mxu0 0.0
  %438 = vmatprep.subr.mxu0 0.0
  %439 = vmatpush1.msra.mxu0 0.0
  %440 = vmatprep.subr.mxu0 0.0
  %441 = vmatpush1.msra.mxu0 0.0
  %442 = vmatprep.mubr.f32.mxu0 0.0
  %443 = vmatmul.mubr.f32.gmra.mrb[0].mxu0 %v376
  %v444 = vpop.f32.mrb[0].mxu0
  %v445 = vadd.f32 0.0, %v444
  %v446 = vpop.f32.mrb[0].mxu0
  %447 = vdwg.mxu0
  %v448 = vadd.f32 %v145, %v445
  %v449 = vmul.f32 %v448, %v182
  %v450 = vtanh.pop %v449
  %v451 = vmul.f32 %v450, %v182
  %v452 = vadd.f32 %v451, %v183
  %453 = vrot.lane.b32.xlu0 %v452, 64
  %v454 = vpop.permute.xlu0 %453
  %v455 = vmul.f32 %v452, %v454
  %v456 = vmul.f32 %v452, %v366
  %458 = vrot.lane.b32.xlu0 %v455, 32
  %v459 = vpop.permute.xlu0 %458
  %v461 = vadd.f32 %v456, %v459
  %v462 = vtanh.pop %v461
  %464 = vrot.lane.b32.xlu0 %v462, 64
  %v465 = vpop.permute.xlu0 %464
  %v467 = vmul.f32 %v452, %v465
  %469 = vrot.lane.b32.xlu0 %v467, 32
  %v470 = vpop.permute.xlu0 %469
  %v471 = vsel %vm184, %v470, 0
  %473 = vmatprep.subr.mxu0 0.0
  %474 = vmatpush1.msra.mxu0 %v173
  %475 = vmatprep.subr.mxu0 0.0
  %476 = vmatpush1.msra.mxu0 %v174
  %477 = vmatprep.subr.mxu0 0.0
  %478 = vmatpush1.msra.mxu0 %v175
  %479 = vmatprep.subr.mxu0 0.0
  %480 = vmatpush1.msra.mxu0 %v176
  %481 = vmatprep.subr.mxu0 0.0
  %482 = vmatpush1.msra.mxu0 0.0
  %483 = vmatprep.subr.mxu0 0.0
  %484 = vmatpush1.msra.mxu0 0.0
  %485 = vmatprep.subr.mxu0 0.0
  %486 = vmatpush1.msra.mxu0 0.0
  %487 = vmatprep.subr.mxu0 0.0
  %488 = vmatpush1.msra.mxu0 0.0
  %489 = vmatprep.subr.mxu0 0.0
  %490 = vmatpush1.msra.mxu0 0.0
  %491 = vmatprep.subr.mxu0 0.0
  %492 = vmatpush1.msra.mxu0 0.0
  %493 = vmatprep.subr.mxu0 0.0
  %494 = vmatpush1.msra.mxu0 0.0
  %495 = vmatprep.subr.mxu0 0.0
  %496 = vmatpush1.msra.mxu0 0.0
  %497 = vmatprep.subr.mxu0 0.0
  %498 = vmatpush1.msra.mxu0 0.0
  %499 = vmatprep.subr.mxu0 0.0
  %500 = vmatpush1.msra.mxu0 0.0
  %501 = vmatprep.subr.mxu0 0.0
  %502 = vmatpush1.msra.mxu0 0.0
  %503 = vmatprep.subr.mxu0 0.0
  %504 = vmatpush1.msra.mxu0 0.0
  %505 = vmatprep.subr.mxu0 0.0
  %506 = vmatpush1.msra.mxu0 0.0
  %507 = vmatprep.subr.mxu0 0.0
  %508 = vmatpush1.msra.mxu0 0.0
  %509 = vmatprep.subr.mxu0 0.0
  %510 = vmatpush1.msra.mxu0 0.0
  %511 = vmatprep.subr.mxu0 0.0
  %512 = vmatpush1.msra.mxu0 0.0
  %513 = vmatprep.subr.mxu0 0.0
  %514 = vmatpush1.msra.mxu0 0.0
  %515 = vmatprep.subr.mxu0 0.0
  %516 = vmatpush1.msra.mxu0 0.0
  %517 = vmatprep.subr.mxu0 0.0
  %518 = vmatpush1.msra.mxu0 0.0
  %519 = vmatprep.subr.mxu0 0.0
  %520 = vmatpush1.msra.mxu0 0.0
  %521 = vmatprep.subr.mxu0 0.0
  %522 = vmatpush1.msra.mxu0 0.0
  %523 = vmatprep.subr.mxu0 0.0
  %524 = vmatpush1.msra.mxu0 0.0
  %525 = vmatprep.subr.mxu0 0.0
  %526 = vmatpush1.msra.mxu0 0.0
  %527 = vmatprep.subr.mxu0 0.0
  %528 = vmatpush1.msra.mxu0 0.0
  %529 = vmatprep.subr.mxu0 0.0
  %530 = vmatpush1.msra.mxu0 0.0
  %531 = vmatprep.subr.mxu0 0.0
  %532 = vmatpush1.msra.mxu0 0.0
  %533 = vmatprep.subr.mxu0 0.0
  %534 = vmatpush1.msra.mxu0 0.0
  %535 = vmatprep.subr.mxu0 0.0
  %536 = vmatpush1.msra.mxu0 0.0
  %537 = vmatprep.mubr.f32.mxu0 0.0
  %538 = vmatmul.mubr.f32.gmra.mrb[0].mxu0 %v471
  %v539 = vpop.f32.mrb[0].mxu0
  %v540 = vadd.f32 0.0, %v539
  %v541 = vpop.f32.mrb[0].mxu0
  %542 = vdwg.mxu0
  %v543 = vadd.f32 %v150, %v540
  %v544 = vmul.f32 %v543, %v182
  %v545 = vtanh.pop %v544
  %v546 = vmul.f32 %v545, %v182
  %v547 = vadd.f32 %v546, %v183
  %548 = vrot.lane.b32.xlu0 %v547, 64
  %v549 = vpop.permute.xlu0 %548
  %v550 = vmul.f32 %v547, %v549
  %v551 = vmul.f32 %v547, %v461
  %553 = vrot.lane.b32.xlu0 %v550, 32
  %v554 = vpop.permute.xlu0 %553
  %v556 = vadd.f32 %v551, %v554
  %v557 = vtanh.pop %v556
  %559 = vrot.lane.b32.xlu0 %v557, 64
  %v560 = vpop.permute.xlu0 %559
  %v562 = vmul.f32 %v547, %v560
  %564 = vrot.lane.b32.xlu0 %v562, 32
  %v565 = vpop.permute.xlu0 %564
  %v566 = vsel %vm184, %v565, 0
  %568 = vmatprep.subr.mxu0 0.0
  %569 = vmatpush1.msra.mxu0 %v173
  %570 = vmatprep.subr.mxu0 0.0
  %571 = vmatpush1.msra.mxu0 %v174
  %572 = vmatprep.subr.mxu0 0.0
  %573 = vmatpush1.msra.mxu0 %v175
  %574 = vmatprep.subr.mxu0 0.0
  %575 = vmatpush1.msra.mxu0 %v176
  %576 = vmatprep.subr.mxu0 0.0
  %577 = vmatpush1.msra.mxu0 0.0
  %578 = vmatprep.subr.mxu0 0.0
  %579 = vmatpush1.msra.mxu0 0.0
  %580 = vmatprep.subr.mxu0 0.0
  %581 = vmatpush1.msra.mxu0 0.0
  %582 = vmatprep.subr.mxu0 0.0
  %583 = vmatpush1.msra.mxu0 0.0
  %584 = vmatprep.subr.mxu0 0.0
  %585 = vmatpush1.msra.mxu0 0.0
  %586 = vmatprep.subr.mxu0 0.0
  %587 = vmatpush1.msra.mxu0 0.0
  %588 = vmatprep.subr.mxu0 0.0
  %589 = vmatpush1.msra.mxu0 0.0
  %590 = vmatprep.subr.mxu0 0.0
  %591 = vmatpush1.msra.mxu0 0.0
  %592 = vmatprep.subr.mxu0 0.0
  %593 = vmatpush1.msra.mxu0 0.0
  %594 = vmatprep.subr.mxu0 0.0
  %595 = vmatpush1.msra.mxu0 0.0
  %596 = vmatprep.subr.mxu0 0.0
  %597 = vmatpush1.msra.mxu0 0.0
  %598 = vmatprep.subr.mxu0 0.0
  %599 = vmatpush1.msra.mxu0 0.0
  %600 = vmatprep.subr.mxu0 0.0
  %601 = vmatpush1.msra.mxu0 0.0
  %602 = vmatprep.subr.mxu0 0.0
  %603 = vmatpush1.msra.mxu0 0.0
  %604 = vmatprep.subr.mxu0 0.0
  %605 = vmatpush1.msra.mxu0 0.0
  %606 = vmatprep.subr.mxu0 0.0
  %607 = vmatpush1.msra.mxu0 0.0
  %608 = vmatprep.subr.mxu0 0.0
  %609 = vmatpush1.msra.mxu0 0.0
  %610 = vmatprep.subr.mxu0 0.0
  %611 = vmatpush1.msra.mxu0 0.0
  %612 = vmatprep.subr.mxu0 0.0
  %613 = vmatpush1.msra.mxu0 0.0
  %614 = vmatprep.subr.mxu0 0.0
  %615 = vmatpush1.msra.mxu0 0.0
  %616 = vmatprep.subr.mxu0 0.0
  %617 = vmatpush1.msra.mxu0 0.0
  %618 = vmatprep.subr.mxu0 0.0
  %619 = vmatpush1.msra.mxu0 0.0
  %620 = vmatprep.subr.mxu0 0.0
  %621 = vmatpush1.msra.mxu0 0.0
  %622 = vmatprep.subr.mxu0 0.0
  %623 = vmatpush1.msra.mxu0 0.0
  %624 = vmatprep.subr.mxu0 0.0
  %625 = vmatpush1.msra.mxu0 0.0
  %626 = vmatprep.subr.mxu0 0.0
  %627 = vmatpush1.msra.mxu0 0.0
  %628 = vmatprep.subr.mxu0 0.0
  %629 = vmatpush1.msra.mxu0 0.0
  %630 = vmatprep.subr.mxu0 0.0
  %631 = vmatpush1.msra.mxu0 0.0
  %632 = vmatprep.mubr.f32.mxu0 0.0
  %633 = vmatmul.mubr.f32.gmra.mrb[0].mxu0 %v566
  %v634 = vpop.f32.mrb[0].mxu0
  %v635 = vadd.f32 0.0, %v634
  %v636 = vpop.f32.mrb[0].mxu0
  %637 = vdwg.mxu0
  %v638 = vadd.f32 %v155, %v635
  %v639 = vmul.f32 %v638, %v182
  %v640 = vtanh.pop %v639
  %v641 = vmul.f32 %v640, %v182
  %v642 = vadd.f32 %v641, %v183
  %643 = vrot.lane.b32.xlu0 %v642, 64
  %v644 = vpop.permute.xlu0 %643
  %v645 = vmul.f32 %v642, %v644
  %v646 = vmul.f32 %v642, %v556
  %648 = vrot.lane.b32.xlu0 %v645, 32
  %v649 = vpop.permute.xlu0 %648
  %v651 = vadd.f32 %v646, %v649
  %v652 = vtanh.pop %v651
  %654 = vrot.lane.b32.xlu0 %v652, 64
  %v655 = vpop.permute.xlu0 %654
  %v657 = vmul.f32 %v642, %v655
  %659 = vrot.lane.b32.xlu0 %v657, 32
  %v660 = vpop.permute.xlu0 %659
  %v661 = vsel %vm184, %v660, 0
  %663 = vmatprep.subr.mxu0 0.0
  %664 = vmatpush1.msra.mxu0 %v173
  %665 = vmatprep.subr.mxu0 0.0
  %666 = vmatpush1.msra.mxu0 %v174
  %667 = vmatprep.subr.mxu0 0.0
  %668 = vmatpush1.msra.mxu0 %v175
  %669 = vmatprep.subr.mxu0 0.0
  %670 = vmatpush1.msra.mxu0 %v176
  %671 = vmatprep.subr.mxu0 0.0
  %672 = vmatpush1.msra.mxu0 0.0
  %673 = vmatprep.subr.mxu0 0.0
  %674 = vmatpush1.msra.mxu0 0.0
  %675 = vmatprep.subr.mxu0 0.0
  %676 = vmatpush1.msra.mxu0 0.0
  %677 = vmatprep.subr.mxu0 0.0
  %678 = vmatpush1.msra.mxu0 0.0
  %679 = vmatprep.subr.mxu0 0.0
  %680 = vmatpush1.msra.mxu0 0.0
  %681 = vmatprep.subr.mxu0 0.0
  %682 = vmatpush1.msra.mxu0 0.0
  %683 = vmatprep.subr.mxu0 0.0
  %684 = vmatpush1.msra.mxu0 0.0
  %685 = vmatprep.subr.mxu0 0.0
  %686 = vmatpush1.msra.mxu0 0.0
  %687 = vmatprep.subr.mxu0 0.0
  %688 = vmatpush1.msra.mxu0 0.0
  %689 = vmatprep.subr.mxu0 0.0
  %690 = vmatpush1.msra.mxu0 0.0
  %691 = vmatprep.subr.mxu0 0.0
  %692 = vmatpush1.msra.mxu0 0.0
  %693 = vmatprep.subr.mxu0 0.0
  %694 = vmatpush1.msra.mxu0 0.0
  %695 = vmatprep.subr.mxu0 0.0
  %696 = vmatpush1.msra.mxu0 0.0
  %697 = vmatprep.subr.mxu0 0.0
  %698 = vmatpush1.msra.mxu0 0.0
  %699 = vmatprep.subr.mxu0 0.0
  %700 = vmatpush1.msra.mxu0 0.0
  %701 = vmatprep.subr.mxu0 0.0
  %702 = vmatpush1.msra.mxu0 0.0
  %703 = vmatprep.subr.mxu0 0.0
  %704 = vmatpush1.msra.mxu0 0.0
  %705 = vmatprep.subr.mxu0 0.0
  %706 = vmatpush1.msra.mxu0 0.0
  %707 = vmatprep.subr.mxu0 0.0
  %708 = vmatpush1.msra.mxu0 0.0
  %709 = vmatprep.subr.mxu0 0.0
  %710 = vmatpush1.msra.mxu0 0.0
  %711 = vmatprep.subr.mxu0 0.0
  %712 = vmatpush1.msra.mxu0 0.0
  %713 = vmatprep.subr.mxu0 0.0
  %714 = vmatpush1.msra.mxu0 0.0
  %715 = vmatprep.subr.mxu0 0.0
  %716 = vmatpush1.msra.mxu0 0.0
  %717 = vmatprep.subr.mxu0 0.0
  %718 = vmatpush1.msra.mxu0 0.0
  %719 = vmatprep.subr.mxu0 0.0
  %720 = vmatpush1.msra.mxu0 0.0
  %721 = vmatprep.subr.mxu0 0.0
  %722 = vmatpush1.msra.mxu0 0.0
  %723 = vmatprep.subr.mxu0 0.0
  %724 = vmatpush1.msra.mxu0 0.0
  %725 = vmatprep.subr.mxu0 0.0
  %726 = vmatpush1.msra.mxu0 0.0
  %727 = vmatprep.mubr.f32.mxu0 0.0
  %728 = vmatmul.mubr.f32.gmra.mrb[0].mxu0 %v661
  %v729 = vpop.f32.mrb[0].mxu0
  %v730 = vadd.f32 0.0, %v729
  %v731 = vpop.f32.mrb[0].mxu0
  %732 = vdwg.mxu0
  %v733 = vadd.f32 %v160, %v730
  %v734 = vmul.f32 %v733, %v182
  %v735 = vtanh.pop %v734
  %v736 = vmul.f32 %v735, %v182
  %v737 = vadd.f32 %v736, %v183
  %738 = vrot.lane.b32.xlu0 %v737, 64
  %v739 = vpop.permute.xlu0 %738
  %v740 = vmul.f32 %v737, %v739
  %v741 = vmul.f32 %v737, %v651
  %743 = vrot.lane.b32.xlu0 %v740, 32
  %v744 = vpop.permute.xlu0 %743
  %v746 = vadd.f32 %v741, %v744
  %v747 = vtanh.pop %v746
  %749 = vrot.lane.b32.xlu0 %v747, 64
  %v750 = vpop.permute.xlu0 %749
  %v752 = vmul.f32 %v737, %v750
  %754 = vrot.lane.b32.xlu0 %v752, 32
  %v755 = vpop.permute.xlu0 %754
  %v756 = vsel %vm184, %v755, 0
  %758 = vmatprep.subr.mxu0 0.0
  %759 = vmatpush1.msra.mxu0 %v173
  %760 = vmatprep.subr.mxu0 0.0
  %761 = vmatpush1.msra.mxu0 %v174
  %762 = vmatprep.subr.mxu0 0.0
  %763 = vmatpush1.msra.mxu0 %v175
  %764 = vmatprep.subr.mxu0 0.0
  %765 = vmatpush1.msra.mxu0 %v176
  %766 = vmatprep.subr.mxu0 0.0
  %767 = vmatpush1.msra.mxu0 0.0
  %768 = vmatprep.subr.mxu0 0.0
  %769 = vmatpush1.msra.mxu0 0.0
  %770 = vmatprep.subr.mxu0 0.0
  %771 = vmatpush1.msra.mxu0 0.0
  %772 = vmatprep.subr.mxu0 0.0
  %773 = vmatpush1.msra.mxu0 0.0
  %774 = vmatprep.subr.mxu0 0.0
  %775 = vmatpush1.msra.mxu0 0.0
  %776 = vmatprep.subr.mxu0 0.0
  %777 = vmatpush1.msra.mxu0 0.0
  %778 = vmatprep.subr.mxu0 0.0
  %779 = vmatpush1.msra.mxu0 0.0
  %780 = vmatprep.subr.mxu0 0.0
  %781 = vmatpush1.msra.mxu0 0.0
  %782 = vmatprep.subr.mxu0 0.0
  %783 = vmatpush1.msra.mxu0 0.0
  %784 = vmatprep.subr.mxu0 0.0
  %785 = vmatpush1.msra.mxu0 0.0
  %786 = vmatprep.subr.mxu0 0.0
  %787 = vmatpush1.msra.mxu0 0.0
  %788 = vmatprep.subr.mxu0 0.0
  %789 = vmatpush1.msra.mxu0 0.0
  %790 = vmatprep.subr.mxu0 0.0
  %791 = vmatpush1.msra.mxu0 0.0
  %792 = vmatprep.subr.mxu0 0.0
  %793 = vmatpush1.msra.mxu0 0.0
  %794 = vmatprep.subr.mxu0 0.0
  %795 = vmatpush1.msra.mxu0 0.0
  %796 = vmatprep.subr.mxu0 0.0
  %797 = vmatpush1.msra.mxu0 0.0
  %798 = vmatprep.subr.mxu0 0.0
  %799 = vmatpush1.msra.mxu0 0.0
  %800 = vmatprep.subr.mxu0 0.0
  %801 = vmatpush1.msra.mxu0 0.0
  %802 = vmatprep.subr.mxu0 0.0
  %803 = vmatpush1.msra.mxu0 0.0
  %804 = vmatprep.subr.mxu0 0.0
  %805 = vmatpush1.msra.mxu0 0.0
  %806 = vmatprep.subr.mxu0 0.0
  %807 = vmatpush1.msra.mxu0 0.0
  %808 = vmatprep.subr.mxu0 0.0
  %809 = vmatpush1.msra.mxu0 0.0
  %810 = vmatprep.subr.mxu0 0.0
  %811 = vmatpush1.msra.mxu0 0.0
  %812 = vmatprep.subr.mxu0 0.0
  %813 = vmatpush1.msra.mxu0 0.0
  %814 = vmatprep.subr.mxu0 0.0
  %815 = vmatpush1.msra.mxu0 0.0
  %816 = vmatprep.subr.mxu0 0.0
  %817 = vmatpush1.msra.mxu0 0.0
  %818 = vmatprep.subr.mxu0 0.0
  %819 = vmatpush1.msra.mxu0 0.0
  %820 = vmatprep.subr.mxu0 0.0
  %821 = vmatpush1.msra.mxu0 0.0
  %822 = vmatprep.mubr.f32.mxu0 0.0
  %823 = vmatmul.mubr.f32.gmra.mrb[0].mxu0 %v756
  %v824 = vpop.f32.mrb[0].mxu0
  %v825 = vadd.f32 0.0, %v824
  %v826 = vpop.f32.mrb[0].mxu0
  %827 = vdwg.mxu0
  %v828 = vadd.f32 %v165, %v825
  %v829 = vmul.f32 %v828, %v182
  %v830 = vtanh.pop %v829
  %v831 = vmul.f32 %v830, %v182
  %v832 = vadd.f32 %v831, %v183
  %833 = vrot.lane.b32.xlu0 %v832, 64
  %v834 = vpop.permute.xlu0 %833
  %v835 = vmul.f32 %v832, %v834
  %v836 = vmul.f32 %v832, %v746
  %838 = vrot.lane.b32.xlu0 %v835, 32
  %v839 = vpop.permute.xlu0 %838
  %v841 = vadd.f32 %v836, %v839
  %v842 = vtanh.pop %v841
  %844 = vrot.lane.b32.xlu0 %v842, 64
  %v845 = vpop.permute.xlu0 %844
  %v847 = vmul.f32 %v832, %v845
  %849 = vrot.lane.b32.xlu0 %v847, 32
  %v850 = vpop.permute.xlu0 %849
  %v851 = vsel %vm184, %v850, 0
  %853 = vmatprep.subr.mxu0 0.0
  %854 = vmatpush1.msra.mxu0 %v173
  %855 = vmatprep.subr.mxu0 0.0
  %856 = vmatpush1.msra.mxu0 %v174
  %857 = vmatprep.subr.mxu0 0.0
  %858 = vmatpush1.msra.mxu0 %v175
  %859 = vmatprep.subr.mxu0 0.0
  %860 = vmatpush1.msra.mxu0 %v176
  %861 = vmatprep.subr.mxu0 0.0
  %862 = vmatpush1.msra.mxu0 0.0
  %863 = vmatprep.subr.mxu0 0.0
  %864 = vmatpush1.msra.mxu0 0.0
  %865 = vmatprep.subr.mxu0 0.0
  %866 = vmatpush1.msra.mxu0 0.0
  %867 = vmatprep.subr.mxu0 0.0
  %868 = vmatpush1.msra.mxu0 0.0
  %869 = vmatprep.subr.mxu0 0.0
  %870 = vmatpush1.msra.mxu0 0.0
  %871 = vmatprep.subr.mxu0 0.0
  %872 = vmatpush1.msra.mxu0 0.0
  %873 = vmatprep.subr.mxu0 0.0
  %874 = vmatpush1.msra.mxu0 0.0
  %875 = vmatprep.subr.mxu0 0.0
  %876 = vmatpush1.msra.mxu0 0.0
  %877 = vmatprep.subr.mxu0 0.0
  %878 = vmatpush1.msra.mxu0 0.0
  %879 = vmatprep.subr.mxu0 0.0
  %880 = vmatpush1.msra.mxu0 0.0
  %881 = vmatprep.subr.mxu0 0.0
  %882 = vmatpush1.msra.mxu0 0.0
  %883 = vmatprep.subr.mxu0 0.0
  %884 = vmatpush1.msra.mxu0 0.0
  %885 = vmatprep.subr.mxu0 0.0
  %886 = vmatpush1.msra.mxu0 0.0
  %887 = vmatprep.subr.mxu0 0.0
  %888 = vmatpush1.msra.mxu0 0.0
  %889 = vmatprep.subr.mxu0 0.0
  %890 = vmatpush1.msra.mxu0 0.0
  %891 = vmatprep.subr.mxu0 0.0
  %892 = vmatpush1.msra.mxu0 0.0
  %893 = vmatprep.subr.mxu0 0.0
  %894 = vmatpush1.msra.mxu0 0.0
  %895 = vmatprep.subr.mxu0 0.0
  %896 = vmatpush1.msra.mxu0 0.0
  %897 = vmatprep.subr.mxu0 0.0
  %898 = vmatpush1.msra.mxu0 0.0
  %899 = vmatprep.subr.mxu0 0.0
  %900 = vmatpush1.msra.mxu0 0.0
  %901 = vmatprep.subr.mxu0 0.0
  %902 = vmatpush1.msra.mxu0 0.0
  %903 = vmatprep.subr.mxu0 0.0
  %904 = vmatpush1.msra.mxu0 0.0
  %905 = vmatprep.subr.mxu0 0.0
  %906 = vmatpush1.msra.mxu0 0.0
  %907 = vmatprep.subr.mxu0 0.0
  %908 = vmatpush1.msra.mxu0 0.0
  %909 = vmatprep.subr.mxu0 0.0
  %910 = vmatpush1.msra.mxu0 0.0
  %911 = vmatprep.subr.mxu0 0.0
  %912 = vmatpush1.msra.mxu0 0.0
  %913 = vmatprep.subr.mxu0 0.0
  %914 = vmatpush1.msra.mxu0 0.0
  %915 = vmatprep.subr.mxu0 0.0
  %916 = vmatpush1.msra.mxu0 0.0
  %917 = vmatprep.mubr.f32.mxu0 0.0
  %918 = vmatmul.mubr.f32.gmra.mrb[0].mxu0 %v851
  %v919 = vpop.f32.mrb[0].mxu0
  %v920 = vadd.f32 0.0, %v919
  %v921 = vpop.f32.mrb[0].mxu0
  %922 = vdwg.mxu0
  %v923 = vadd.f32 %v170, %v920
  %v924 = vmul.f32 %v923, %v182
  %v925 = vtanh.pop %v924
  %v926 = vmul.f32 %v925, %v182
  %v927 = vadd.f32 %v926, %v183
  %928 = vrot.lane.b32.xlu0 %v927, 64
  %v929 = vpop.permute.xlu0 %928
  %v930 = vmul.f32 %v927, %v929
  %v931 = vmul.f32 %v927, %v841
  %933 = vrot.lane.b32.xlu0 %v930, 32
  %v934 = vpop.permute.xlu0 %933
  %v936 = vadd.f32 %v931, %v934
  %v937 = vtanh.pop %v936
  %939 = vrot.lane.b32.xlu0 %v937, 64
  %v940 = vpop.permute.xlu0 %939
  %v942 = vmul.f32 %v927, %v940
  %v943 = vld [vmem:[%s4] sm:$0xff]
  %v944 = vld [vmem:[%s4 + $0x8] sm:$0xff]
  %v945 = vld [vmem:[%s4 + $0x10] sm:$0xff]
  %v946 = vld [vmem:[%s4 + $0x18] sm:$0xff]
  %v947 = vld [vmem:[%s5] sm:$0x1]
  %v949 = vlaneseq
  %v950 = vshrl.u32 %v949, 7
  %v951 = vsub.s32 0, %v950
  %v952 = vrot.slane %v947, %v951
  %955 = vrot.lane.b32.xlu0 %v942, 32
  %v956 = vpop.permute.xlu0 %955
  %v957 = vsel %vm184, %v956, 0
  %959 = vmatprep.subr.mxu0 0.0
  %960 = vmatpush1.msra.mxu0 %v943
  %961 = vmatprep.subr.mxu0 0.0
  %962 = vmatpush1.msra.mxu0 %v944
  %963 = vmatprep.subr.mxu0 0.0
  %964 = vmatpush1.msra.mxu0 %v945
  %965 = vmatprep.subr.mxu0 0.0
  %966 = vmatpush1.msra.mxu0 %v946
  %967 = vmatprep.subr.mxu0 0.0
  %968 = vmatpush1.msra.mxu0 0.0
  %969 = vmatprep.subr.mxu0 0.0
  %970 = vmatpush1.msra.mxu0 0.0
  %971 = vmatprep.subr.mxu0 0.0
  %972 = vmatpush1.msra.mxu0 0.0
  %973 = vmatprep.subr.mxu0 0.0
  %974 = vmatpush1.msra.mxu0 0.0
  %975 = vmatprep.subr.mxu0 0.0
  %976 = vmatpush1.msra.mxu0 0.0
  %977 = vmatprep.subr.mxu0 0.0
  %978 = vmatpush1.msra.mxu0 0.0
  %979 = vmatprep.subr.mxu0 0.0
  %980 = vmatpush1.msra.mxu0 0.0
  %981 = vmatprep.subr.mxu0 0.0
  %982 = vmatpush1.msra.mxu0 0.0
  %983 = vmatprep.subr.mxu0 0.0
  %984 = vmatpush1.msra.mxu0 0.0
  %985 = vmatprep.subr.mxu0 0.0
  %986 = vmatpush1.msra.mxu0 0.0
  %987 = vmatprep.subr.mxu0 0.0
  %988 = vmatpush1.msra.mxu0 0.0
  %989 = vmatprep.subr.mxu0 0.0
  %990 = vmatpush1.msra.mxu0 0.0
  %991 = vmatprep.subr.mxu0 0.0
  %992 = vmatpush1.msra.mxu0 0.0
  %993 = vmatprep.subr.mxu0 0.0
  %994 = vmatpush1.msra.mxu0 0.0
  %995 = vmatprep.subr.mxu0 0.0
  %996 = vmatpush1.msra.mxu0 0.0
  %997 = vmatprep.subr.mxu0 0.0
  %998 = vmatpush1.msra.mxu0 0.0
  %999 = vmatprep.subr.mxu0 0.0
  %1000 = vmatpush1.msra.mxu0 0.0
  %1001 = vmatprep.subr.mxu0 0.0
  %1002 = vmatpush1.msra.mxu0 0.0
  %1003 = vmatprep.subr.mxu0 0.0
  %1004 = vmatpush1.msra.mxu0 0.0
  %1005 = vmatprep.subr.mxu0 0.0
  %1006 = vmatpush1.msra.mxu0 0.0
  %1007 = vmatprep.subr.mxu0 0.0
  %1008 = vmatpush1.msra.mxu0 0.0
  %1009 = vmatprep.subr.mxu0 0.0
  %1010 = vmatpush1.msra.mxu0 0.0
  %1011 = vmatprep.subr.mxu0 0.0
  %1012 = vmatpush1.msra.mxu0 0.0
  %1013 = vmatprep.subr.mxu0 0.0
  %1014 = vmatpush1.msra.mxu0 0.0
  %1015 = vmatprep.subr.mxu0 0.0
  %1016 = vmatpush1.msra.mxu0 0.0
  %1017 = vmatprep.subr.mxu0 0.0
  %1018 = vmatpush1.msra.mxu0 0.0
  %1019 = vmatprep.subr.mxu0 0.0
  %1020 = vmatpush1.msra.mxu0 0.0
  %1021 = vmatprep.subr.mxu0 0.0
  %1022 = vmatpush1.msra.mxu0 0.0
  %1023 = vmatprep.mubr.f32.mxu0 0.0
  %1024 = vmatmul.mubr.f32.gmra.mrb[0].mxu0 %v957
  %v1025 = vpop.f32.mrb[0].mxu0
  %v1026 = vadd.f32 %v952, %v1025
  %v1027 = vpop.f32.mrb[0].mxu0
  %1028 = vdwg.mxu0
  %1029 = vst.msk [vmem:[%s6] sm:$0xff] %vm39, %v1026
  // Predicated region
  $region26: #{lstm_model_forward.1} parent=0 // pred_check
    _
  $region27: #{lstm_model_forward.1} parent=0 // pred_check_branch
    %1031 = sbr.rel (0) target = $region29
  $region28: #{lstm_model_forward.1} parent=0 // pred_region
    _
  $region29: #{lstm_model_forward.1} parent=0 // pred_fallthru
    _
  // Predicated region
  $region30: #{lstm_model_forward.1} parent=0 // pred_check
    _
  $region31: #{lstm_model_forward.1} parent=0 // pred_check_branch
    %1033 = sbr.rel (0) target = $region33
  $region32: #{lstm_model_forward.1} parent=0 // pred_region
    _
  $region33: #{lstm_model_forward.1} parent=0 // pred_fallthru
    _

</llo_original>
